<compile_context>
chip_gen: v5e
topology: v5e:2x2
jax: 0.10.0
libtpu: 0.0.40
codegen_flags: <defaults>
</compile_context>

<pallas_src>
import functools

import jax
import jax.numpy as jnp
from jax.experimental import pallas as pl
from jax.experimental.pallas import tpu as pltpu

LANE = 128      # TPU lane width
SUBLANE = 8     # f32 sublane width


def _round_up(x, m):
    return ((x + m - 1) // m) * m


# ---------------------------------------------------------------------------
# Pallas kernel: fused 3-layer MLP on one batch tile
#   Linear(bf16 MXU, f32 acc) -> ReLU(f32) -> Linear -> ReLU -> Linear
# ---------------------------------------------------------------------------
def _mlp_kernel(x_ref, w0_ref, b0_ref, w1_ref, b1_ref, w2_ref, b2_ref, out_ref):
    # bf16 cast happens here (VPU work hidden under the MXU), not in the wrapper.
    x = x_ref[...].astype(jnp.bfloat16)                      # (TM, inp_pad)

    # fc0 + relu0   (bf16 MXU matmul, f32 accumulate, f32 bias/ReLU)
    h = jnp.dot(x, w0_ref[...], preferred_element_type=jnp.float32) + b0_ref[...]
    h = jnp.maximum(h, 0.0)

    # fc1 + relu1
    h = jnp.dot(h.astype(jnp.bfloat16), w1_ref[...],
                preferred_element_type=jnp.float32) + b1_ref[...]
    h = jnp.maximum(h, 0.0)

    # fc2: final projection to the lane-padded num_tasks; no activation (matches the module).
    out = jnp.dot(h.astype(jnp.bfloat16), w2_ref[...],
                  preferred_element_type=jnp.float32) + b2_ref[...]
    out_ref[...] = out.astype(out_ref.dtype)


# ---------------------------------------------------------------------------
# Wrapper
# ---------------------------------------------------------------------------
def mlp_proj_pallas(view, params, num_tasks, *, tm_cap=512, vmem_budget=48 << 20):
    """DownstreamModel MLP projection head as a batch-tiled Pallas kernel.

    view:      [batch, inp_dim] embedding (backbone output), any float dtype.
    params:    dict with w0,b0,w1,b1,w2,b2.  Weights bf16, stored [in, out] and zero-padded to
               multiples of 128 on every axis; biases f32 [1, out_pad].
    num_tasks: logical output width (<= padded width of w2).
    """
    batch = view.shape[0]
    inp_pad, hidden_pad = params["w0"].shape
    n_pad = params["w2"].shape[1]

    # Match the zero-row-padded w0.  Ideally the backbone already emits a lane-dense (multiple of
    # 128) embedding and this is a no-op; it only triggers for narrow inp_dim.
    if view.shape[1] != inp_pad:
        view = jnp.pad(view, ((0, 0), (0, inp_pad - view.shape[1])))

    # Batch tile: multiple of 8 sublanes, capped, and aimed at >= 2 tiles so both v7x
    # TensorCores get work ("parallel" grid axis).  No batch padding: ragged tail is masked.
    tm = max(SUBLANE, min(tm_cap, _round_up(max(1, -(-batch // 2)), SUBLANE)))

    def _vmem_bytes(tm_):
        w_bytes = sum(int(params[k].size) * params[k].dtype.itemsize for k in params)
        x_tile = 2 * tm_ * inp_pad * view.dtype.itemsize      # double-buffered activation tile
        o_tile = 2 * tm_ * n_pad * 4                          # double-buffered output tile
        h_tmp = 2 * tm_ * hidden_pad * 4                      # f32 intermediates
        return w_bytes + x_tile + o_tile + h_tmp

    # Shrink tm if the estimate would not fit the budget (keeps v7x's 64 MiB VMEM safe).
    while _vmem_bytes(tm) > vmem_budget and tm > SUBLANE:
        tm = max(SUBLANE, _round_up(tm // 2, SUBLANE))

    grid_m = pl.cdiv(batch, tm)
    vmem_limit = min(64 << 20, max(16 << 20, int(_vmem_bytes(tm) * 1.25)))

    flops = 2 * batch * (inp_pad * hidden_pad + hidden_pad * hidden_pad + hidden_pad * n_pad)
    bytes_accessed = (
        view.size * view.dtype.itemsize
        + sum(int(params[k].size) * params[k].dtype.itemsize for k in params)
        + batch * n_pad * 4
    )

    # Constant-index weights/biases: single-buffered, VMEM-resident across the whole grid.
    resident = dict(pipeline_mode=pl.Buffered(1))

    out_padded = pl.pallas_call(
        _mlp_kernel,
        out_shape=jax.ShapeDtypeStruct((batch, n_pad), jnp.float32),
        grid=(grid_m,),
        in_specs=[
            # batch-tiled activation, backbone dtype (cast in-kernel)
            pl.BlockSpec((tm, inp_pad), lambda i: (i, 0)),
            # VMEM-resident weights / biases (same block every grid step)
            pl.BlockSpec((inp_pad, hidden_pad), lambda i: (0, 0), **resident),
            pl.BlockSpec((1, hidden_pad), lambda i: (0, 0), **resident),
            pl.BlockSpec((hidden_pad, hidden_pad), lambda i: (0, 0), **resident),
            pl.BlockSpec((1, hidden_pad), lambda i: (0, 0), **resident),
            pl.BlockSpec((hidden_pad, n_pad), lambda i: (0, 0), **resident),
            pl.BlockSpec((1, n_pad), lambda i: (0, 0), **resident),
        ],
        out_specs=pl.BlockSpec((tm, n_pad), lambda i: (i, 0)),
        compiler_params=pltpu.CompilerParams(
            dimension_semantics=("parallel",),      # shard batch tiles across TCs on v7x
            vmem_limit_bytes=vmem_limit,
        ),
        cost_estimate=pl.CostEstimate(
            flops=flops, transcendentals=0, bytes_accessed=bytes_accessed),
    )(view,
      params["w0"], params["b0"],
      params["w1"], params["b1"],
      params["w2"], params["b2"])

    # Strip lane padding on the task dimension (module returns [batch, num_tasks]).
    return out_padded[:, :num_tasks]


# ---------------------------------------------------------------------------
# Deterministic parameter init (mimics nn.Linear uniform(-1/sqrt(fan_in), ...)).
# Weights stored pre-transposed [in, out] in bf16, zero-padded to multiples of 128 on both axes;
# biases f32 [1, out_pad].  Zero padding does not change the math.
# ---------------------------------------------------------------------------
def init_mlp_params(key, inp_dim, hidden_dim, num_tasks):
    inp_pad = _round_up(max(inp_dim, LANE), LANE)
    hid_pad = _round_up(max(hidden_dim, LANE), LANE)
    n_pad = _round_up(max(num_tasks, LANE), LANE)
    dims = [
        (inp_dim, hidden_dim, inp_pad, hid_pad),   # fc0
        (hidden_dim, hidden_dim, hid_pad, hid_pad),  # fc1
        (hidden_dim, num_tasks, hid_pad, n_pad),   # fc2
    ]
    params = {}
    for i, (fan_in, fan_out, in_p, out_p) in enumerate(dims):
        key, kw, kb = jax.random.split(key, 3)
        bound = 1.0 / (fan_in ** 0.5)
        w = jax.random.uniform(kw, (fan_in, fan_out), jnp.float32,
                               minval=-bound, maxval=bound)
        b = jax.random.uniform(kb, (1, fan_out), jnp.float32,
                               minval=-bound, maxval=bound)
        w = jnp.pad(w, ((0, in_p - fan_in), (0, out_p - fan_out)))
        b = jnp.pad(b, ((0, 0), (0, out_p - fan_out)))
        params[f"w{i}"] = w.astype(jnp.bfloat16)
        params[f"b{i}"] = b  # biases stay f32 (bias-add on the f32 VPU path)
    return params


# ---------------------------------------------------------------------------
# Pure-JAX reference with identical rounding (bf16 matmul inputs, f32 accumulation).
# ---------------------------------------------------------------------------
def ref_forward(view, params, num_tasks):
    inp_pad = params["w0"].shape[0]
    if view.shape[1] != inp_pad:
        view = jnp.pad(view, ((0, 0), (0, inp_pad - view.shape[1])))
    h = jnp.dot(view.astype(jnp.bfloat16), params["w0"],
                preferred_element_type=jnp.float32) + params["b0"]
    h = jnp.maximum(h, 0.0)
    h = jnp.dot(h.astype(jnp.bfloat16), params["w1"],
                preferred_element_type=jnp.float32) + params["b1"]
    h = jnp.maximum(h, 0.0)
    out = jnp.dot(h.astype(jnp.bfloat16), params["w2"],
                  preferred_element_type=jnp.float32) + params["b2"]
    return out[:, :num_tasks]


if __name__ == "__main__":
    # Small config consistent with MLP(inp_dim, hidden_dim, num_layers=3, num_tasks)
    batch, inp_dim, hidden_dim, num_tasks = 8, 32, 32, 8

    key = jax.random.PRNGKey(0)
    key, k_view = jax.random.split(key)

    # `view` stands in for the (unspecified) backbone output embedding.
    view = jax.random.normal(k_view, (batch, inp_dim), dtype=jnp.float32)
    params = init_mlp_params(key, inp_dim, hidden_dim, num_tasks)

    run = jax.jit(functools.partial(mlp_proj_pallas, num_tasks=num_tasks))
    pred = jax.block_until_ready(run(view, params))

    ref = ref_forward(view, params, num_tasks)

    assert pred.shape == (batch, num_tasks)
    assert jnp.allclose(pred, ref, atol=2e-3, rtol=2e-3), (
        float(jnp.max(jnp.abs(pred - ref))))

    print("KERNEL_OK")
</pallas_src>

<mosaic_0001>
module attributes {stable_mosaic.version = 11 : i64} {
  func.func @_mlp_kernel(%arg0: i32, %arg1: memref<8x128xf32, #tpu.memory_space<vmem>>, %arg2: memref<128x128xbf16, #tpu.memory_space<vmem>>, %arg3: memref<1x128xf32, #tpu.memory_space<vmem>>, %arg4: memref<128x128xbf16, #tpu.memory_space<vmem>>, %arg5: memref<1x128xf32, #tpu.memory_space<vmem>>, %arg6: memref<128x128xbf16, #tpu.memory_space<vmem>>, %arg7: memref<1x128xf32, #tpu.memory_space<vmem>>, %arg8: memref<8x128xf32, #tpu.memory_space<vmem>>) attributes {dimension_semantics = [#tpu.dimension_semantics<parallel>], iteration_bounds = array<i64: 1>, scalar_prefetch = 0 : i64, scratch_operands = 0 : i64, tpu.core_type = #tpu.core_type<tc>, window_params = [{transform_indices = @transform_0, window_bounds = array<i64: 8, 128>}, {pipeline_mode = #tpu.pipeline_mode<synchronous>, transform_indices = @transform_1, window_bounds = array<i64: 128, 128>}, {pipeline_mode = #tpu.pipeline_mode<synchronous>, transform_indices = @transform_2, window_bounds = array<i64: 1, 128>}, {pipeline_mode = #tpu.pipeline_mode<synchronous>, transform_indices = @transform_3, window_bounds = array<i64: 128, 128>}, {pipeline_mode = #tpu.pipeline_mode<synchronous>, transform_indices = @transform_4, window_bounds = array<i64: 1, 128>}, {pipeline_mode = #tpu.pipeline_mode<synchronous>, transform_indices = @transform_5, window_bounds = array<i64: 128, 128>}, {pipeline_mode = #tpu.pipeline_mode<synchronous>, transform_indices = @transform_6, window_bounds = array<i64: 1, 128>}, {transform_indices = @transform_7, window_bounds = array<i64: 8, 128>}]} {
    %c0 = arith.constant 0 : index
    %c0_0 = arith.constant 0 : index
    %0 = vector.load %arg1[%c0, %c0_0] : memref<8x128xf32, #tpu.memory_space<vmem>>, vector<8x128xf32>
    %1 = arith.truncf %0 : vector<8x128xf32> to vector<8x128xbf16>
    %c0_1 = arith.constant 0 : index
    %c0_2 = arith.constant 0 : index
    %2 = vector.load %arg2[%c0_1, %c0_2] : memref<128x128xbf16, #tpu.memory_space<vmem>>, vector<128x128xbf16>
    %cst = arith.constant dense<0.000000e+00> : vector<8x128xf32>
    %3 = tpu.matmul %1, %2, %cst {dimension_numbers = #tpu.dot_dimension_numbers<[1], [0], [0], [1], [0, 0, 1, 1], [], []>} : vector<8x128xbf16>, vector<128x128xbf16>, vector<8x128xf32> -> vector<8x128xf32>
    %c0_3 = arith.constant 0 : index
    %c0_4 = arith.constant 0 : index
    %4 = vector.load %arg3[%c0_3, %c0_4] : memref<1x128xf32, #tpu.memory_space<vmem>>, vector<1x128xf32>
    %5 = vector.broadcast %4 : vector<1x128xf32> to vector<8x128xf32>
    %6 = arith.addf %3, %5 : vector<8x128xf32>
    %cst_5 = arith.constant 0.000000e+00 : f32
    %7 = vector.broadcast %cst_5 : f32 to vector<8x128xf32>
    %8 = arith.maximumf %6, %7 : vector<8x128xf32>
    %9 = arith.truncf %8 : vector<8x128xf32> to vector<8x128xbf16>
    %c0_6 = arith.constant 0 : index
    %c0_7 = arith.constant 0 : index
    %10 = vector.load %arg4[%c0_6, %c0_7] : memref<128x128xbf16, #tpu.memory_space<vmem>>, vector<128x128xbf16>
    %cst_8 = arith.constant dense<0.000000e+00> : vector<8x128xf32>
    %11 = tpu.matmul %9, %10, %cst_8 {dimension_numbers = #tpu.dot_dimension_numbers<[1], [0], [0], [1], [0, 0, 1, 1], [], []>} : vector<8x128xbf16>, vector<128x128xbf16>, vector<8x128xf32> -> vector<8x128xf32>
    %c0_9 = arith.constant 0 : index
    %c0_10 = arith.constant 0 : index
    %12 = vector.load %arg5[%c0_9, %c0_10] : memref<1x128xf32, #tpu.memory_space<vmem>>, vector<1x128xf32>
    %13 = vector.broadcast %12 : vector<1x128xf32> to vector<8x128xf32>
    %14 = arith.addf %11, %13 : vector<8x128xf32>
    %cst_11 = arith.constant 0.000000e+00 : f32
    %15 = vector.broadcast %cst_11 : f32 to vector<8x128xf32>
    %16 = arith.maximumf %14, %15 : vector<8x128xf32>
    %17 = arith.truncf %16 : vector<8x128xf32> to vector<8x128xbf16>
    %c0_12 = arith.constant 0 : index
    %c0_13 = arith.constant 0 : index
    %18 = vector.load %arg6[%c0_12, %c0_13] : memref<128x128xbf16, #tpu.memory_space<vmem>>, vector<128x128xbf16>
    %cst_14 = arith.constant dense<0.000000e+00> : vector<8x128xf32>
    %19 = tpu.matmul %17, %18, %cst_14 {dimension_numbers = #tpu.dot_dimension_numbers<[1], [0], [0], [1], [0, 0, 1, 1], [], []>} : vector<8x128xbf16>, vector<128x128xbf16>, vector<8x128xf32> -> vector<8x128xf32>
    %c0_15 = arith.constant 0 : index
    %c0_16 = arith.constant 0 : index
    %20 = vector.load %arg7[%c0_15, %c0_16] : memref<1x128xf32, #tpu.memory_space<vmem>>, vector<1x128xf32>
    %21 = vector.broadcast %20 : vector<1x128xf32> to vector<8x128xf32>
    %22 = arith.addf %19, %21 : vector<8x128xf32>
    %c0_17 = arith.constant 0 : index
    %c0_18 = arith.constant 0 : index
    %23 = vector.load %arg8[%c0_17, %c0_18] : memref<8x128xf32, #tpu.memory_space<vmem>>, vector<8x128xf32>
    tpu.vector_store %arg8[%c0_17, %c0_18], %22 {strides = array<i32>} : memref<8x128xf32, #tpu.memory_space<vmem>>, vector<8x128xf32>,
    return
  }
  func.func @transform_0(%arg0: i32) -> (i32, i32) {
    %c0_i32 = arith.constant 0 : i32
    %c0_i32_0 = arith.constant 0 : i32
    return %arg0, %c0_i32 : i32, i32
  }
  func.func @transform_1(%arg0: i32) -> (i32, i32) {
    %c0_i32 = arith.constant 0 : i32
    %c0_i32_0 = arith.constant 0 : i32
    %c0_i32_1 = arith.constant 0 : i32
    return %c0_i32, %c0_i32_0 : i32, i32
  }
  func.func @transform_2(%arg0: i32) -> (i32, i32) {
    %c0_i32 = arith.constant 0 : i32
    %c0_i32_0 = arith.constant 0 : i32
    %c0_i32_1 = arith.constant 0 : i32
    return %c0_i32, %c0_i32_0 : i32, i32
  }
  func.func @transform_3(%arg0: i32) -> (i32, i32) {
    %c0_i32 = arith.constant 0 : i32
    %c0_i32_0 = arith.constant 0 : i32
    %c0_i32_1 = arith.constant 0 : i32
    return %c0_i32, %c0_i32_0 : i32, i32
  }
  func.func @transform_4(%arg0: i32) -> (i32, i32) {
    %c0_i32 = arith.constant 0 : i32
    %c0_i32_0 = arith.constant 0 : i32
    %c0_i32_1 = arith.constant 0 : i32
    return %c0_i32, %c0_i32_0 : i32, i32
  }
  func.func @transform_5(%arg0: i32) -> (i32, i32) {
    %c0_i32 = arith.constant 0 : i32
    %c0_i32_0 = arith.constant 0 : i32
    %c0_i32_1 = arith.constant 0 : i32
    return %c0_i32, %c0_i32_0 : i32, i32
  }
  func.func @transform_6(%arg0: i32) -> (i32, i32) {
    %c0_i32 = arith.constant 0 : i32
    %c0_i32_0 = arith.constant 0 : i32
    %c0_i32_1 = arith.constant 0 : i32
    return %c0_i32, %c0_i32_0 : i32, i32
  }
  func.func @transform_7(%arg0: i32) -> (i32, i32) {
    %c0_i32 = arith.constant 0 : i32
    %c0_i32_0 = arith.constant 0 : i32
    return %arg0, %c0_i32 : i32, i32
  }
}

</mosaic_0001>

<llo_original>
// kernel: mlp_proj_pallas.1
$region0: #{mlp_proj_pallas.1}
  #allocation0 [shape = 'u32[]', space=smem, size = 0x4, offset = 0x4, fixed_abs, tag = 'smem constant byte address 0x4 - core index']
  #allocation1 [shape = 'u32[72,128]{1,0:T(1,128)}', space=vmem, size = 0x9000, scoped, tag = 'internal scratch']
  %s0 = inlined_call_operand.vmem [shape: f32[8,128], index: 0, kind: input, shape index: {}]
  %s1 = inlined_call_operand.hbm [shape: bf16[128,128], index: 1, kind: input, shape index: {}]
  %s2 = inlined_call_operand.vmem [shape: f32[1,128], index: 2, kind: input, shape index: {}]
  %s3 = inlined_call_operand.hbm [shape: bf16[128,128], index: 3, kind: input, shape index: {}]
  %s4 = inlined_call_operand.vmem [shape: f32[1,128], index: 4, kind: input, shape index: {}]
  %s5 = inlined_call_operand.hbm [shape: bf16[128,128], index: 5, kind: input, shape index: {}]
  %s6 = inlined_call_operand.vmem [shape: f32[1,128], index: 6, kind: input, shape index: {}]
  %s7 = inlined_call_operand.hbm [shape: f32[8,128], index: 7, kind: output, shape index: {}]
  %s8 = sld [smem:[#allocation0]]
  $region50: #{mlp_proj_pallas.1} parent=0
    _
  %s10 = ssub.s32 1, %s8
  %s11 = scalar_select 0, %s10, %s8
  $region1: #{mlp_proj_pallas.1} parent=0
    #allocation2 [shape = 'u8[32768]{0}', space=vmem, size = 0x8000, scoped, tag = 'input window, operand 1, single buffered']
    #allocation3 [shape = 's32[1]{0}', space=sflag, size = 0x4, scoped, tag = 'scoped memory for mlp_proj_pallas.1']
    #allocation4 [shape = 's32[1]{0}', space=sflag, size = 0x4, scoped, tag = 'scoped memory for mlp_proj_pallas.1']
    #allocation5 [shape = 'u8[32768]{0}', space=vmem, size = 0x8000, scoped, tag = 'input window, operand 3, single buffered']
    #allocation6 [shape = 's32[1]{0}', space=sflag, size = 0x4, scoped, tag = 'scoped memory for mlp_proj_pallas.1']
    #allocation7 [shape = 'u8[32768]{0}', space=vmem, size = 0x8000, scoped, tag = 'input window, operand 5, single buffered']
    #allocation8 [shape = 'u8[4096]{0}', space=vmem, size = 0x1000, scoped, tag = 'output window, operand 0, single buffered']
    %12 = vsyncpa [#allocation3], 0
    %13 = vsyncpa [#allocation6], 0
    %14 = vsyncpa [#allocation4], 0
    // Predicated region
    $region2: #{mlp_proj_pallas.1} parent=1 // pred_check
      _
    $region3: #{mlp_proj_pallas.1} parent=1 // pred_check_branch
      %16 = sbr.rel (0) target = $region5
    $region4: #{mlp_proj_pallas.1} parent=1 // pred_region
      _
    $region5: #{mlp_proj_pallas.1} parent=1 // pred_fallthru
      _
    // Predicated region
    $region6: #{mlp_proj_pallas.1} parent=1 // pred_check
      _
    $region7: #{mlp_proj_pallas.1} parent=1 // pred_check_branch
      %18 = sbr.rel (0) target = $region9
    $region8: #{mlp_proj_pallas.1} parent=1 // pred_region
      %20 = vsyncadd [#allocation3], 0
      %s21 = sshll.u32 %s1, 4
      %s22 = int_to_ptr.hbm [resolvable:$true] %s21
      %s23 = sshll.u32 [#allocation2], 4
      %s24 = int_to_ptr.vmem [resolvable:$true] %s23
      %29 = dma.hbm_to_vmem [thread:$0]  %s22, 1024, %s24, [#allocation3], 64, 64, 4
    $region9: #{mlp_proj_pallas.1} parent=1 // pred_fallthru
      _
    // Predicated region
    $region10: #{mlp_proj_pallas.1} parent=1 // pred_check
      _
    $region11: #{mlp_proj_pallas.1} parent=1 // pred_check_branch
      %31 = sbr.rel (0) target = $region13
    $region12: #{mlp_proj_pallas.1} parent=1 // pred_region
      _
    $region13: #{mlp_proj_pallas.1} parent=1 // pred_fallthru
      _
    // Predicated region
    $region14: #{mlp_proj_pallas.1} parent=1 // pred_check
      _
    $region15: #{mlp_proj_pallas.1} parent=1 // pred_check_branch
      %33 = sbr.rel (0) target = $region17
    $region16: #{mlp_proj_pallas.1} parent=1 // pred_region
      %35 = vsyncadd [#allocation6], 0
      %s36 = sshll.u32 %s3, 4
      %s37 = int_to_ptr.hbm [resolvable:$true] %s36
      %s38 = sshll.u32 [#allocation5], 4
      %s39 = int_to_ptr.vmem [resolvable:$true] %s38
      %44 = dma.hbm_to_vmem [thread:$0]  %s37, 1024, %s39, [#allocation6], 64, 64, 4
    $region17: #{mlp_proj_pallas.1} parent=1 // pred_fallthru
      _
    // Predicated region
    $region18: #{mlp_proj_pallas.1} parent=1 // pred_check
      _
    $region19: #{mlp_proj_pallas.1} parent=1 // pred_check_branch
      %46 = sbr.rel (0) target = $region21
    $region20: #{mlp_proj_pallas.1} parent=1 // pred_region
      _
    $region21: #{mlp_proj_pallas.1} parent=1 // pred_fallthru
      _
    // Predicated region
    $region22: #{mlp_proj_pallas.1} parent=1 // pred_check
      _
    $region23: #{mlp_proj_pallas.1} parent=1 // pred_check_branch
      %48 = sbr.rel (0) target = $region25
    $region24: #{mlp_proj_pallas.1} parent=1 // pred_region
      %50 = vsyncadd [#allocation6], 0
      %s51 = sshll.u32 %s5, 4
      %s52 = int_to_ptr.hbm [resolvable:$true] %s51
      %s53 = sshll.u32 [#allocation7], 4
      %s54 = int_to_ptr.vmem [resolvable:$true] %s53
      %59 = dma.hbm_to_vmem [thread:$0]  %s52, 1024, %s54, [#allocation6], 64, 64, 4
    $region25: #{mlp_proj_pallas.1} parent=1 // pred_fallthru
      _
    // Predicated region
    $region26: #{mlp_proj_pallas.1} parent=1 // pred_check
      _
    $region27: #{mlp_proj_pallas.1} parent=1 // pred_check_branch
      %61 = sbr.rel (0) target = $region29
    $region28: #{mlp_proj_pallas.1} parent=1 // pred_region
      _
    $region29: #{mlp_proj_pallas.1} parent=1 // pred_fallthru
      _
    // Predicated region
    $region30: #{mlp_proj_pallas.1} parent=1 // pred_check
      _
    $region31: #{mlp_proj_pallas.1} parent=1 // pred_check_branch
      %63 = sbr.rel (0) target = $region33
    $region32: #{mlp_proj_pallas.1} parent=1 // pred_region
      %65 = dma.done [#allocation3], 1024
    $region33: #{mlp_proj_pallas.1} parent=1 // pred_fallthru
      _
    // Predicated region
    $region34: #{mlp_proj_pallas.1} parent=1 // pred_check
      _
    $region35: #{mlp_proj_pallas.1} parent=1 // pred_check_branch
      %67 = sbr.rel (0) target = $region37
    $region36: #{mlp_proj_pallas.1} parent=1 // pred_region
      %69 = dma.done [#allocation6], 1024
    $region37: #{mlp_proj_pallas.1} parent=1 // pred_fallthru
      _
    // Predicated region
    $region38: #{mlp_proj_pallas.1} parent=1 // pred_check
      _
    $region39: #{mlp_proj_pallas.1} parent=1 // pred_check_branch
      %71 = sbr.rel (0) target = $region41
    $region40: #{mlp_proj_pallas.1} parent=1 // pred_region
      %73 = dma.done [#allocation6], 1024
    $region41: #{mlp_proj_pallas.1} parent=1 // pred_fallthru
      _
    %v74 = vld [vmem:[%s0] sm:$0xff]
    %v75 = vpack.c.bf16 %v74, %v74
    %v76 = vld [vmem:[#allocation2] sm:$0xf]
    %v77 = vld [vmem:[#allocation2 + $0x4] sm:$0xf]
    %v78 = vld [vmem:[#allocation2 + $0x8] sm:$0xf]
    %v79 = vld [vmem:[#allocation2 + $0xc] sm:$0xf]
    %v80 = vld [vmem:[#allocation2 + $0x10] sm:$0xf]
    %v81 = vld [vmem:[#allocation2 + $0x14] sm:$0xf]
    %v82 = vld [vmem:[#allocation2 + $0x18] sm:$0xf]
    %v83 = vld [vmem:[#allocation2 + $0x1c] sm:$0xf]
    %v84 = vld [vmem:[#allocation2 + $0x20] sm:$0xf]
    %v85 = vld [vmem:[#allocation2 + $0x24] sm:$0xf]
    %v86 = vld [vmem:[#allocation2 + $0x28] sm:$0xf]
    %v87 = vld [vmem:[#allocation2 + $0x2c] sm:$0xf]
    %v88 = vld [vmem:[#allocation2 + $0x30] sm:$0xf]
    %v89 = vld [vmem:[#allocation2 + $0x34] sm:$0xf]
    %v90 = vld [vmem:[#allocation2 + $0x38] sm:$0xf]
    %v91 = vld [vmem:[#allocation2 + $0x3c] sm:$0xf]
    %v92 = vld [vmem:[%s2] sm:$0x1]
    %v94 = vperm.slane %v92, 0
    %v112 = vunpack.c.l.b16 %v76
    %v113 = vunpack.c.l.b16 %v77
    %v114 = vunpack.c.l.b16 %v78
    %v115 = vunpack.c.l.b16 %v79
    %v116 = vunpack.c.l.b16 %v80
    %v117 = vunpack.c.l.b16 %v81
    %v118 = vunpack.c.l.b16 %v82
    %v119 = vunpack.c.l.b16 %v83
    %v120 = vunpack.c.l.b16 %v84
    %v121 = vunpack.c.l.b16 %v85
    %v122 = vunpack.c.l.b16 %v86
    %v123 = vunpack.c.l.b16 %v87
    %v124 = vunpack.c.l.b16 %v88
    %v125 = vunpack.c.l.b16 %v89
    %v126 = vunpack.c.l.b16 %v90
    %v127 = vunpack.c.l.b16 %v91
    %v128 = vpack.c.b16 %v113, %v112
    %v129 = vpack.c.b16 %v115, %v114
    %v130 = vpack.c.b16 %v117, %v116
    %v131 = vpack.c.b16 %v119, %v118
    %v132 = vpack.c.b16 %v121, %v120
    %v133 = vpack.c.b16 %v123, %v122
    %v134 = vpack.c.b16 %v125, %v124
    %v135 = vpack.c.b16 %v127, %v126
    %144 = vmatpush.bf16.msra.mxu0 %v135
    %145 = vmatpush.bf16.msra.mxu0 %v134
    %146 = vmatpush.bf16.msra.mxu0 %v133
    %147 = vmatpush.bf16.msra.mxu0 %v132
    %148 = vmatpush.bf16.msra.mxu0 %v131
    %149 = vmatpush.bf16.msra.mxu0 %v130
    %150 = vmatpush.bf16.msra.mxu0 %v129
    %151 = vmatpush.bf16.msra.mxu0 %v128
    %152 = vmatmul.bf16.gmra.mxu0 %v75
    %v153 = vpop.f32.mrf.mxu0
    %v154 = vadd.f32 %v94, %v153
    %v155 = vpop.f32.mrf.mxu0
    %156 = vdwg.mxu0
    %v157 = vmax.f32 %v154, 0.0
    %v158 = vpack.c.bf16 %v157, %v157
    %v159 = vld [vmem:[#allocation5] sm:$0xf]
    %v160 = vld [vmem:[#allocation5 + $0x4] sm:$0xf]
    %v161 = vld [vmem:[#allocation5 + $0x8] sm:$0xf]
    %v162 = vld [vmem:[#allocation5 + $0xc] sm:$0xf]
    %v163 = vld [vmem:[#allocation5 + $0x10] sm:$0xf]
    %v164 = vld [vmem:[#allocation5 + $0x14] sm:$0xf]
    %v165 = vld [vmem:[#allocation5 + $0x18] sm:$0xf]
    %v166 = vld [vmem:[#allocation5 + $0x1c] sm:$0xf]
    %v167 = vld [vmem:[#allocation5 + $0x20] sm:$0xf]
    %v168 = vld [vmem:[#allocation5 + $0x24] sm:$0xf]
    %v169 = vld [vmem:[#allocation5 + $0x28] sm:$0xf]
    %v170 = vld [vmem:[#allocation5 + $0x2c] sm:$0xf]
    %v171 = vld [vmem:[#allocation5 + $0x30] sm:$0xf]
    %v172 = vld [vmem:[#allocation5 + $0x34] sm:$0xf]
    %v173 = vld [vmem:[#allocation5 + $0x38] sm:$0xf]
    %v174 = vld [vmem:[#allocation5 + $0x3c] sm:$0xf]
    %v175 = vld [vmem:[%s4] sm:$0x1]
    %v177 = vperm.slane %v175, 0
    %v195 = vunpack.c.l.b16 %v159
    %v196 = vunpack.c.l.b16 %v160
    %v197 = vunpack.c.l.b16 %v161
    %v198 = vunpack.c.l.b16 %v162
    %v199 = vunpack.c.l.b16 %v163
    %v200 = vunpack.c.l.b16 %v164
    %v201 = vunpack.c.l.b16 %v165
    %v202 = vunpack.c.l.b16 %v166
    %v203 = vunpack.c.l.b16 %v167
    %v204 = vunpack.c.l.b16 %v168
    %v205 = vunpack.c.l.b16 %v169
    %v206 = vunpack.c.l.b16 %v170
    %v207 = vunpack.c.l.b16 %v171
    %v208 = vunpack.c.l.b16 %v172
    %v209 = vunpack.c.l.b16 %v173
    %v210 = vunpack.c.l.b16 %v174
    %v211 = vpack.c.b16 %v196, %v195
    %v212 = vpack.c.b16 %v198, %v197
    %v213 = vpack.c.b16 %v200, %v199
    %v214 = vpack.c.b16 %v202, %v201
    %v215 = vpack.c.b16 %v204, %v203
    %v216 = vpack.c.b16 %v206, %v205
    %v217 = vpack.c.b16 %v208, %v207
    %v218 = vpack.c.b16 %v210, %v209
    %227 = vmatpush.bf16.msra.mxu0 %v218
    %228 = vmatpush.bf16.msra.mxu0 %v217
    %229 = vmatpush.bf16.msra.mxu0 %v216
    %230 = vmatpush.bf16.msra.mxu0 %v215
    %231 = vmatpush.bf16.msra.mxu0 %v214
    %232 = vmatpush.bf16.msra.mxu0 %v213
    %233 = vmatpush.bf16.msra.mxu0 %v212
    %234 = vmatpush.bf16.msra.mxu0 %v211
    %235 = vmatmul.bf16.gmra.mxu0 %v158
    %v236 = vpop.f32.mrf.mxu0
    %v237 = vadd.f32 %v177, %v236
    %v238 = vpop.f32.mrf.mxu0
    %239 = vdwg.mxu0
    %v240 = vmax.f32 %v237, 0.0
    %v241 = vpack.c.bf16 %v240, %v240
    %v242 = vld [vmem:[#allocation7] sm:$0xf]
    %v243 = vld [vmem:[#allocation7 + $0x4] sm:$0xf]
    %v244 = vld [vmem:[#allocation7 + $0x8] sm:$0xf]
    %v245 = vld [vmem:[#allocation7 + $0xc] sm:$0xf]
    %v246 = vld [vmem:[#allocation7 + $0x10] sm:$0xf]
    %v247 = vld [vmem:[#allocation7 + $0x14] sm:$0xf]
    %v248 = vld [vmem:[#allocation7 + $0x18] sm:$0xf]
    %v249 = vld [vmem:[#allocation7 + $0x1c] sm:$0xf]
    %v250 = vld [vmem:[#allocation7 + $0x20] sm:$0xf]
    %v251 = vld [vmem:[#allocation7 + $0x24] sm:$0xf]
    %v252 = vld [vmem:[#allocation7 + $0x28] sm:$0xf]
    %v253 = vld [vmem:[#allocation7 + $0x2c] sm:$0xf]
    %v254 = vld [vmem:[#allocation7 + $0x30] sm:$0xf]
    %v255 = vld [vmem:[#allocation7 + $0x34] sm:$0xf]
    %v256 = vld [vmem:[#allocation7 + $0x38] sm:$0xf]
    %v257 = vld [vmem:[#allocation7 + $0x3c] sm:$0xf]
    %v258 = vld [vmem:[%s6] sm:$0x1]
    %v260 = vperm.slane %v258, 0
    %v278 = vunpack.c.l.b16 %v242
    %v279 = vunpack.c.l.b16 %v243
    %v280 = vunpack.c.l.b16 %v244
    %v281 = vunpack.c.l.b16 %v245
    %v282 = vunpack.c.l.b16 %v246
    %v283 = vunpack.c.l.b16 %v247
    %v284 = vunpack.c.l.b16 %v248
    %v285 = vunpack.c.l.b16 %v249
    %v286 = vunpack.c.l.b16 %v250
    %v287 = vunpack.c.l.b16 %v251
    %v288 = vunpack.c.l.b16 %v252
    %v289 = vunpack.c.l.b16 %v253
    %v290 = vunpack.c.l.b16 %v254
    %v291 = vunpack.c.l.b16 %v255
    %v292 = vunpack.c.l.b16 %v256
    %v293 = vunpack.c.l.b16 %v257
    %v294 = vpack.c.b16 %v279, %v278
    %v295 = vpack.c.b16 %v281, %v280
    %v296 = vpack.c.b16 %v283, %v282
    %v297 = vpack.c.b16 %v285, %v284
    %v298 = vpack.c.b16 %v287, %v286
    %v299 = vpack.c.b16 %v289, %v288
    %v300 = vpack.c.b16 %v291, %v290
    %v301 = vpack.c.b16 %v293, %v292
    %310 = vmatpush.bf16.msra.mxu0 %v301
    %311 = vmatpush.bf16.msra.mxu0 %v300
    %312 = vmatpush.bf16.msra.mxu0 %v299
    %313 = vmatpush.bf16.msra.mxu0 %v298
    %314 = vmatpush.bf16.msra.mxu0 %v297
    %315 = vmatpush.bf16.msra.mxu0 %v296
    %316 = vmatpush.bf16.msra.mxu0 %v295
    %317 = vmatpush.bf16.msra.mxu0 %v294
    %318 = vmatmul.bf16.gmra.mxu0 %v241
    %v319 = vpop.f32.mrf.mxu0
    %v320 = vadd.f32 %v260, %v319
    %v321 = vpop.f32.mrf.mxu0
    %322 = vdwg.mxu0
    %323 = vst [vmem:[#allocation8] sm:$0xff] %v320
    // Predicated region
    $region42: #{mlp_proj_pallas.1} parent=1 // pred_check
      _
    $region43: #{mlp_proj_pallas.1} parent=1 // pred_check_branch
      %325 = sbr.rel (0) target = $region45
    $region44: #{mlp_proj_pallas.1} parent=1 // pred_region
      %327 = vsyncadd [#allocation4], 0
      %s329 = sshll.u32 [#allocation8], 4
      %s330 = int_to_ptr.vmem [resolvable:$true] %s329
      %s331 = sshll.u32 %s7, 4
      %s332 = int_to_ptr.hbm [resolvable:$true] %s331
      %334 = dma.vmem_to_hbm [thread:$0]  %s330, 128, %s332, [#allocation4]
    $region45: #{mlp_proj_pallas.1} parent=1 // pred_fallthru
      _
    // Predicated region
    $region46: #{mlp_proj_pallas.1} parent=1 // pred_check
      _
    $region47: #{mlp_proj_pallas.1} parent=1 // pred_check_branch
      %336 = sbr.rel (0) target = $region49
    $region48: #{mlp_proj_pallas.1} parent=1 // pred_region
      %338 = dma.done [#allocation4], 128
    $region49: #{mlp_proj_pallas.1} parent=1 // pred_fallthru
      _
    %339 = vsyncpa [#allocation3], 1
    %340 = vsyncpa [#allocation6], 1
    %341 = vsyncpa [#allocation4], 1

</llo_original>
